<compile_context>
chip_gen: v6e
topology: v6e:2x2x1
jax: 0.10.0
libtpu: 0.0.40
codegen_flags: <defaults>
</compile_context>

<pallas_src>
import functools

import numpy as np
import jax
import jax.numpy as jnp
from jax.experimental import pallas as pl
from jax.experimental.pallas import tpu as pltpu

HIDDEN_LAYERS = 6
HIDDEN_NODES = 20
INPUT_DIM = 2
OUTPUT_DIM = 1
DEFAULT_SWR = 0.2   # MultiphaseParams.Swr default


def _round_up(x, m):
    return ((x + m - 1) // m) * m


def _tensorcores_per_chip():
    """Best-effort TensorCore count per chip (v7x/v4/v5p: 2, v5e/v6e: 1)."""
    try:
        info = pltpu.get_tpu_info()
        for name in ("num_cores", "tensor_cores_per_chip", "num_tensorcores",
                     "cores_per_chip"):
            n = getattr(info, name, None)
            if isinstance(n, int) and n > 0:
                return n
    except Exception:
        pass
    try:
        kind = jax.devices()[0].device_kind.lower()
        if any(tag in kind for tag in ("v7", "tpu7", "7x", "v4", "v5p")):
            return 2
    except Exception:
        pass
    return 1


def _choose_tiles(batch, max_tile_b, n_cores):
    """Generation-aware (tile_b, grid_n)."""
    b128 = _round_up(max(batch, 1), 128)
    max_tile = max(512, _round_up(max_tile_b, 512))   # keep tile a 512-lane multiple
    if n_cores <= 1:
        # v5e/v6e: fewest grid steps wins -> one fat tile if the batch fits it.
        tile_b = b128 if b128 <= max_tile else max_tile
    else:
        # v7x megacore: a multiple-of-n_cores number of equal tiles (balanced).
        n_tiles = _round_up(max(pl.cdiv(b128, max_tile), n_cores), n_cores)
        tile_b = _round_up(pl.cdiv(batch, n_tiles), 128)
    grid_n = pl.cdiv(batch, tile_b)   # never emit fully-out-of-range blocks
    return tile_b, grid_n


def pinn_kernel(x_ref, hid_ref, io_ref, out_ref, *, swr):
    H = HIDDEN_NODES
    x = x_ref[...]           # (2, TB)  batch on lanes
    io = io_ref[...]         # (H, 5) = [w_in^T col0 | col1 | b_in | w_out | b_out]

    # Input layer on the VPU (two broadcast FMAs) instead of a K=2 MXU matmul.
    y = jnp.tanh(io[:, 0:1] * x[0:1, :] + io[:, 1:2] * x[1:2, :] + io[:, 2:3])

    # 6 hidden PINNBlocks, statically unrolled (small fixed depth), on the MXU.
    for l in range(HIDDEN_LAYERS):
        wb = hid_ref[l]      # (H, H+1) = [W_l^T | b_l]
        y = jnp.tanh(
            jnp.dot(wb[:, :H], y, preferred_element_type=jnp.float32)
            + wb[:, H:H + 1])

    # Output head (single row): sublane reduce on the XLU instead of a 1-row matmul.
    sw = jnp.sum(io[:, 3:4] * y, axis=0, keepdims=True) + io[0:1, 4:5]
    out_ref[...] = jax.nn.sigmoid(sw) * (1.0 - swr) + swr


def pack_params(params):
    """Pack 7 weight/bias arrays into 2 grid-invariant operands.

    hid_pack: (L, H, H+1) = [W_l^T | b_l]
    io_pack:  (H, 5)      = [w_in^T[:,0], w_in^T[:,1], b_in, w_out, b_out(bcast)]
    """
    H = HIDDEN_NODES
    w_in = params["w_in"]                      # (2, H)     stored (in, out)
    b_in = params["b_in"].reshape(H)
    w_hid = params["w_hid"]                    # (L, H, H)  stored (in, out)
    b_hid = params["b_hid"]                    # (L, H)
    w_out = params["w_out"].reshape(H)         # (H, 1) -> (H,)
    b_out = params["b_out"].reshape(())

    hid_pack = jnp.concatenate(
        [jnp.transpose(w_hid, (0, 2, 1)), b_hid[:, :, None]], axis=-1)
    io_pack = jnp.stack(
        [w_in[0], w_in[1], b_in, w_out, jnp.full((H,), b_out, jnp.float32)],
        axis=-1)
    return hid_pack.astype(jnp.float32), io_pack.astype(jnp.float32)


def pinn_forward_t(x_t, params, *, swr=DEFAULT_SWR, max_tile_b=2048):
    """x_t: (2, B) float32 (batch already on the lane axis) -> (1, B) float32.

    Preferred entry point: producing collocation points directly as (2, B)
    avoids an extra HBM transpose pass that can exceed this tiny kernel's
    own runtime.
    """
    assert x_t.shape[0] == INPUT_DIM
    B = int(x_t.shape[1])
    H, L = HIDDEN_NODES, HIDDEN_LAYERS

    hid_pack, io_pack = pack_params(params)
    n_cores = _tensorcores_per_chip()
    tile_b, grid_n = _choose_tiles(B, max_tile_b, n_cores)

    cols = grid_n * tile_b
    cost = pl.CostEstimate(
        flops=2 * cols * (INPUT_DIM * H + L * H * H + H * OUTPUT_DIM),
        transcendentals=cols * ((L + 1) * H + OUTPUT_DIM),
        bytes_accessed=4 * (B * (INPUT_DIM + OUTPUT_DIM)
                            + int(hid_pack.size) + int(io_pack.size)),
    )

    out = pl.pallas_call(
        functools.partial(pinn_kernel, swr=float(swr)),
        out_shape=jax.ShapeDtypeStruct((OUTPUT_DIM, B), jnp.float32),
        grid=(grid_n,),
        in_specs=[
            pl.BlockSpec((INPUT_DIM, tile_b), lambda i: (0, i)),   # x: batch on lanes
            pl.BlockSpec(hid_pack.shape, lambda i: (0, 0, 0)),     # grid-invariant
            pl.BlockSpec(io_pack.shape, lambda i: (0, 0)),         # grid-invariant
        ],
        out_specs=pl.BlockSpec((OUTPUT_DIM, tile_b), lambda i: (0, i)),
        compiler_params=pltpu.CompilerParams(
            dimension_semantics=("parallel",)),
        cost_estimate=cost,
    )(x_t, hid_pack, io_pack)
    return out


def pinn_forward(x, params, *, swr=DEFAULT_SWR, max_tile_b=2048):
    """PyTorch-convention entry point: x (B, 2) -> (B, 1)."""
    return pinn_forward_t(x.T, params, swr=swr, max_tile_b=max_tile_b).T


def xavier_uniform(key, fan_in, fan_out):
    bound = np.sqrt(6.0 / (fan_in + fan_out))
    # Stored as (in, out) -> reference computes x @ W (same math as PyTorch x @ W_pt.T)
    return jax.random.uniform(key, (fan_in, fan_out), jnp.float32, -bound, bound)


def init_params(key):
    keys = jax.random.split(key, HIDDEN_LAYERS + 2)
    w_in = xavier_uniform(keys[0], INPUT_DIM, HIDDEN_NODES)
    b_in = jnp.zeros((1, HIDDEN_NODES), jnp.float32)
    w_hid = jnp.stack(
        [xavier_uniform(keys[1 + l], HIDDEN_NODES, HIDDEN_NODES)
         for l in range(HIDDEN_LAYERS)], axis=0)                     # (L, H, H) (in,out)
    b_hid = jnp.zeros((HIDDEN_LAYERS, HIDDEN_NODES), jnp.float32)    # (L, H)
    w_out = xavier_uniform(keys[-1], HIDDEN_NODES, OUTPUT_DIM)
    b_out = jnp.zeros((1, OUTPUT_DIM), jnp.float32)
    return dict(w_in=w_in, b_in=b_in, w_hid=w_hid, b_hid=b_hid,
                w_out=w_out, b_out=b_out)


def pinn_forward_ref(x, p, swr=DEFAULT_SWR):
    """Pure-JAX reference (mirrors PyTorch forward) for correctness check."""
    y = jnp.tanh(x @ p["w_in"] + p["b_in"])
    for l in range(HIDDEN_LAYERS):
        y = jnp.tanh(y @ p["w_hid"][l] + p["b_hid"][l][None, :])
    sw = y @ p["w_out"] + p["b_out"]
    return jax.nn.sigmoid(sw) * (1.0 - swr) + swr


# TODO(synk): relative_permeability / fractional_flow / dfg_dsw (autograd of fg
# w.r.t. sw) are auxiliary physics helpers, not part of forward(); not kernelized.

if __name__ == "__main__":
    key = jax.random.PRNGKey(0)
    k_params, k_x1, k_x2 = jax.random.split(key, 3)
    params = init_params(k_params)

    # (x_D, t_D) collocation points in [0, 1].
    x = jax.random.uniform(k_x1, (256, 2), jnp.float32)
    out = jax.block_until_ready(pinn_forward(x, params))
    ref = pinn_forward_ref(x, params)
    np.testing.assert_allclose(np.asarray(out), np.asarray(ref),
                               rtol=1e-5, atol=1e-5)

    # Non-128-multiple batch exercises the masked partial tail block.
    x2 = jax.random.uniform(k_x2, (100, 2), jnp.float32)
    out2 = jax.block_until_ready(pinn_forward(x2, params))
    np.testing.assert_allclose(np.asarray(out2),
                               np.asarray(pinn_forward_ref(x2, params)),
                               rtol=1e-5, atol=1e-5)

    print("KERNEL_OK")
</pallas_src>

<mosaic_0001>
module attributes {stable_mosaic.version = 11 : i64} {
  func.func @pinn_kernel(%arg0: i32, %arg1: memref<2x256xf32, #tpu.memory_space<vmem>>, %arg2: memref<6x20x21xf32, #tpu.memory_space<vmem>>, %arg3: memref<20x5xf32, #tpu.memory_space<vmem>>, %arg4: memref<1x256xf32, #tpu.memory_space<vmem>>) attributes {dimension_semantics = [#tpu.dimension_semantics<parallel>], iteration_bounds = array<i64: 1>, scalar_prefetch = 0 : i64, scratch_operands = 0 : i64, tpu.core_type = #tpu.core_type<tc>, window_params = [{transform_indices = @transform_0, window_bounds = array<i64: 2, 256>}, {pipeline_mode = #tpu.pipeline_mode<synchronous>, transform_indices = @transform_1, window_bounds = array<i64: 6, 20, 21>}, {pipeline_mode = #tpu.pipeline_mode<synchronous>, transform_indices = @transform_2, window_bounds = array<i64: 20, 5>}, {transform_indices = @transform_3, window_bounds = array<i64: 1, 256>}]} {
    %c0 = arith.constant 0 : index
    %c0_0 = arith.constant 0 : index
    %0 = vector.load %arg1[%c0, %c0_0] : memref<2x256xf32, #tpu.memory_space<vmem>>, vector<2x256xf32>
    %c0_1 = arith.constant 0 : index
    %c0_2 = arith.constant 0 : index
    %1 = vector.load %arg3[%c0_1, %c0_2] : memref<20x5xf32, #tpu.memory_space<vmem>>, vector<20x5xf32>
    %2 = vector.extract_strided_slice %1 {offsets = [0, 0], sizes = [20, 1], strides = [1, 1]} : vector<20x5xf32> to vector<20x1xf32>
    %3 = vector.extract_strided_slice %0 {offsets = [0, 0], sizes = [1, 256], strides = [1, 1]} : vector<2x256xf32> to vector<1x256xf32>
    %4 = vector.broadcast %2 : vector<20x1xf32> to vector<20x256xf32>
    %5 = vector.broadcast %3 : vector<1x256xf32> to vector<20x256xf32>
    %6 = arith.mulf %4, %5 : vector<20x256xf32>
    %7 = vector.extract_strided_slice %1 {offsets = [0, 1], sizes = [20, 1], strides = [1, 1]} : vector<20x5xf32> to vector<20x1xf32>
    %8 = vector.extract_strided_slice %0 {offsets = [1, 0], sizes = [1, 256], strides = [1, 1]} : vector<2x256xf32> to vector<1x256xf32>
    %9 = vector.broadcast %7 : vector<20x1xf32> to vector<20x256xf32>
    %10 = vector.broadcast %8 : vector<1x256xf32> to vector<20x256xf32>
    %11 = arith.mulf %9, %10 : vector<20x256xf32>
    %12 = arith.addf %6, %11 : vector<20x256xf32>
    %13 = vector.extract_strided_slice %1 {offsets = [0, 2], sizes = [20, 1], strides = [1, 1]} : vector<20x5xf32> to vector<20x1xf32>
    %14 = vector.broadcast %13 : vector<20x1xf32> to vector<20x256xf32>
    %15 = arith.addf %12, %14 : vector<20x256xf32>
    %16 = math.tanh %15 : vector<20x256xf32>
    %c0_3 = arith.constant 0 : index
    %c0_4 = arith.constant 0 : index
    %c0_5 = arith.constant 0 : index
    %17 = vector.load %arg2[%c0_3, %c0_4, %c0_5] : memref<6x20x21xf32, #tpu.memory_space<vmem>>, vector<1x20x21xf32>
    %18 = vector.shape_cast %17 : vector<1x20x21xf32> to vector<20x21xf32>
    %19 = vector.extract_strided_slice %18 {offsets = [0, 0], sizes = [20, 20], strides = [1, 1]} : vector<20x21xf32> to vector<20x20xf32>
    %cst = arith.constant dense<0.000000e+00> : vector<20x256xf32>
    %20 = tpu.matmul %19, %16, %cst {dimension_numbers = #tpu.dot_dimension_numbers<[1], [0], [0], [1], [0, 0, 1, 1], [], []>} : vector<20x20xf32>, vector<20x256xf32>, vector<20x256xf32> -> vector<20x256xf32>
    %21 = vector.extract_strided_slice %18 {offsets = [0, 20], sizes = [20, 1], strides = [1, 1]} : vector<20x21xf32> to vector<20x1xf32>
    %22 = vector.broadcast %21 : vector<20x1xf32> to vector<20x256xf32>
    %23 = arith.addf %20, %22 : vector<20x256xf32>
    %24 = math.tanh %23 : vector<20x256xf32>
    %c1 = arith.constant 1 : index
    %c0_6 = arith.constant 0 : index
    %c0_7 = arith.constant 0 : index
    %25 = vector.load %arg2[%c1, %c0_6, %c0_7] : memref<6x20x21xf32, #tpu.memory_space<vmem>>, vector<1x20x21xf32>
    %26 = vector.shape_cast %25 : vector<1x20x21xf32> to vector<20x21xf32>
    %27 = vector.extract_strided_slice %26 {offsets = [0, 0], sizes = [20, 20], strides = [1, 1]} : vector<20x21xf32> to vector<20x20xf32>
    %cst_8 = arith.constant dense<0.000000e+00> : vector<20x256xf32>
    %28 = tpu.matmul %27, %24, %cst_8 {dimension_numbers = #tpu.dot_dimension_numbers<[1], [0], [0], [1], [0, 0, 1, 1], [], []>} : vector<20x20xf32>, vector<20x256xf32>, vector<20x256xf32> -> vector<20x256xf32>
    %29 = vector.extract_strided_slice %26 {offsets = [0, 20], sizes = [20, 1], strides = [1, 1]} : vector<20x21xf32> to vector<20x1xf32>
    %30 = vector.broadcast %29 : vector<20x1xf32> to vector<20x256xf32>
    %31 = arith.addf %28, %30 : vector<20x256xf32>
    %32 = math.tanh %31 : vector<20x256xf32>
    %c2 = arith.constant 2 : index
    %c0_9 = arith.constant 0 : index
    %c0_10 = arith.constant 0 : index
    %33 = vector.load %arg2[%c2, %c0_9, %c0_10] : memref<6x20x21xf32, #tpu.memory_space<vmem>>, vector<1x20x21xf32>
    %34 = vector.shape_cast %33 : vector<1x20x21xf32> to vector<20x21xf32>
    %35 = vector.extract_strided_slice %34 {offsets = [0, 0], sizes = [20, 20], strides = [1, 1]} : vector<20x21xf32> to vector<20x20xf32>
    %cst_11 = arith.constant dense<0.000000e+00> : vector<20x256xf32>
    %36 = tpu.matmul %35, %32, %cst_11 {dimension_numbers = #tpu.dot_dimension_numbers<[1], [0], [0], [1], [0, 0, 1, 1], [], []>} : vector<20x20xf32>, vector<20x256xf32>, vector<20x256xf32> -> vector<20x256xf32>
    %37 = vector.extract_strided_slice %34 {offsets = [0, 20], sizes = [20, 1], strides = [1, 1]} : vector<20x21xf32> to vector<20x1xf32>
    %38 = vector.broadcast %37 : vector<20x1xf32> to vector<20x256xf32>
    %39 = arith.addf %36, %38 : vector<20x256xf32>
    %40 = math.tanh %39 : vector<20x256xf32>
    %c3 = arith.constant 3 : index
    %c0_12 = arith.constant 0 : index
    %c0_13 = arith.constant 0 : index
    %41 = vector.load %arg2[%c3, %c0_12, %c0_13] : memref<6x20x21xf32, #tpu.memory_space<vmem>>, vector<1x20x21xf32>
    %42 = vector.shape_cast %41 : vector<1x20x21xf32> to vector<20x21xf32>
    %43 = vector.extract_strided_slice %42 {offsets = [0, 0], sizes = [20, 20], strides = [1, 1]} : vector<20x21xf32> to vector<20x20xf32>
    %cst_14 = arith.constant dense<0.000000e+00> : vector<20x256xf32>
    %44 = tpu.matmul %43, %40, %cst_14 {dimension_numbers = #tpu.dot_dimension_numbers<[1], [0], [0], [1], [0, 0, 1, 1], [], []>} : vector<20x20xf32>, vector<20x256xf32>, vector<20x256xf32> -> vector<20x256xf32>
    %45 = vector.extract_strided_slice %42 {offsets = [0, 20], sizes = [20, 1], strides = [1, 1]} : vector<20x21xf32> to vector<20x1xf32>
    %46 = vector.broadcast %45 : vector<20x1xf32> to vector<20x256xf32>
    %47 = arith.addf %44, %46 : vector<20x256xf32>
    %48 = math.tanh %47 : vector<20x256xf32>
    %c4 = arith.constant 4 : index
    %c0_15 = arith.constant 0 : index
    %c0_16 = arith.constant 0 : index
    %49 = vector.load %arg2[%c4, %c0_15, %c0_16] : memref<6x20x21xf32, #tpu.memory_space<vmem>>, vector<1x20x21xf32>
    %50 = vector.shape_cast %49 : vector<1x20x21xf32> to vector<20x21xf32>
    %51 = vector.extract_strided_slice %50 {offsets = [0, 0], sizes = [20, 20], strides = [1, 1]} : vector<20x21xf32> to vector<20x20xf32>
    %cst_17 = arith.constant dense<0.000000e+00> : vector<20x256xf32>
    %52 = tpu.matmul %51, %48, %cst_17 {dimension_numbers = #tpu.dot_dimension_numbers<[1], [0], [0], [1], [0, 0, 1, 1], [], []>} : vector<20x20xf32>, vector<20x256xf32>, vector<20x256xf32> -> vector<20x256xf32>
    %53 = vector.extract_strided_slice %50 {offsets = [0, 20], sizes = [20, 1], strides = [1, 1]} : vector<20x21xf32> to vector<20x1xf32>
    %54 = vector.broadcast %53 : vector<20x1xf32> to vector<20x256xf32>
    %55 = arith.addf %52, %54 : vector<20x256xf32>
    %56 = math.tanh %55 : vector<20x256xf32>
    %c5 = arith.constant 5 : index
    %c0_18 = arith.constant 0 : index
    %c0_19 = arith.constant 0 : index
    %57 = vector.load %arg2[%c5, %c0_18, %c0_19] : memref<6x20x21xf32, #tpu.memory_space<vmem>>, vector<1x20x21xf32>
    %58 = vector.shape_cast %57 : vector<1x20x21xf32> to vector<20x21xf32>
    %59 = vector.extract_strided_slice %58 {offsets = [0, 0], sizes = [20, 20], strides = [1, 1]} : vector<20x21xf32> to vector<20x20xf32>
    %cst_20 = arith.constant dense<0.000000e+00> : vector<20x256xf32>
    %60 = tpu.matmul %59, %56, %cst_20 {dimension_numbers = #tpu.dot_dimension_numbers<[1], [0], [0], [1], [0, 0, 1, 1], [], []>} : vector<20x20xf32>, vector<20x256xf32>, vector<20x256xf32> -> vector<20x256xf32>
    %61 = vector.extract_strided_slice %58 {offsets = [0, 20], sizes = [20, 1], strides = [1, 1]} : vector<20x21xf32> to vector<20x1xf32>
    %62 = vector.broadcast %61 : vector<20x1xf32> to vector<20x256xf32>
    %63 = arith.addf %60, %62 : vector<20x256xf32>
    %64 = math.tanh %63 : vector<20x256xf32>
    %65 = vector.extract_strided_slice %1 {offsets = [0, 3], sizes = [20, 1], strides = [1, 1]} : vector<20x5xf32> to vector<20x1xf32>
    %66 = vector.broadcast %65 : vector<20x1xf32> to vector<20x256xf32>
    %67 = arith.mulf %66, %64 : vector<20x256xf32>
    %cst_21 = arith.constant dense<0.000000e+00> : vector<256xf32>
    %68 = vector.multi_reduction <add>, %67, %cst_21 [0] : vector<20x256xf32> to vector<256xf32>
    %69 = vector.shape_cast %68 : vector<256xf32> to vector<1x256xf32>
    %70 = vector.extract_strided_slice %1 {offsets = [0, 4], sizes = [1, 1], strides = [1, 1]} : vector<20x5xf32> to vector<1x1xf32>
    %71 = vector.broadcast %70 : vector<1x1xf32> to vector<1x256xf32>
    %72 = arith.addf %69, %71 : vector<1x256xf32>
    %73 = arith.negf %72 : vector<1x256xf32>
    %74 = math.exp %73 : vector<1x256xf32>
    %cst_22 = arith.constant 1.000000e+00 : f32
    %75 = vector.broadcast %cst_22 : f32 to vector<1x256xf32>
    %76 = arith.addf %75, %74 : vector<1x256xf32>
    %77 = arith.divf %75, %76 : vector<1x256xf32>
    %cst_23 = arith.constant 8.000000e-01 : f32
    %78 = vector.broadcast %cst_23 : f32 to vector<1x256xf32>
    %79 = arith.mulf %77, %78 : vector<1x256xf32>
    %cst_24 = arith.constant 2.000000e-01 : f32
    %80 = vector.broadcast %cst_24 : f32 to vector<1x256xf32>
    %81 = arith.addf %79, %80 : vector<1x256xf32>
    %c0_25 = arith.constant 0 : index
    %c0_26 = arith.constant 0 : index
    %82 = vector.load %arg4[%c0_25, %c0_26] : memref<1x256xf32, #tpu.memory_space<vmem>>, vector<1x256xf32>
    tpu.vector_store %arg4[%c0_25, %c0_26], %81 {strides = array<i32>} : memref<1x256xf32, #tpu.memory_space<vmem>>, vector<1x256xf32>,
    return
  }
  func.func @transform_0(%arg0: i32) -> (i32, i32) {
    %c0_i32 = arith.constant 0 : i32
    %c0_i32_0 = arith.constant 0 : i32
    return %c0_i32, %arg0 : i32, i32
  }
  func.func @transform_1(%arg0: i32) -> (i32, i32, i32) {
    %c0_i32 = arith.constant 0 : i32
    %c0_i32_0 = arith.constant 0 : i32
    %c0_i32_1 = arith.constant 0 : i32
    %c0_i32_2 = arith.constant 0 : i32
    return %c0_i32, %c0_i32_0, %c0_i32_1 : i32, i32, i32
  }
  func.func @transform_2(%arg0: i32) -> (i32, i32) {
    %c0_i32 = arith.constant 0 : i32
    %c0_i32_0 = arith.constant 0 : i32
    %c0_i32_1 = arith.constant 0 : i32
    return %c0_i32, %c0_i32_0 : i32, i32
  }
  func.func @transform_3(%arg0: i32) -> (i32, i32) {
    %c0_i32 = arith.constant 0 : i32
    %c0_i32_0 = arith.constant 0 : i32
    return %c0_i32, %arg0 : i32, i32
  }
}

</mosaic_0001>

<llo_original>
// kernel: tpu_custom_call.1
$region0: #{tpu_custom_call.1}
  #allocation0 [shape = 'u32[]', space=smem, size = 0x4, offset = 0x4, fixed_abs, tag = 'smem constant byte address 0x4 - core index']
  #allocation1 [shape = 'u32[144,128]{1,0:T(1,128)}', space=vmem, size = 0x12000, scoped, tag = 'internal scratch']
  %s0 = inlined_call_operand.vmem [shape: f32[2,256], index: 0, kind: input, shape index: {}]
  %s1 = inlined_call_operand.hbm [shape: f32[6,20,21], index: 1, kind: input, shape index: {}]
  %s2 = inlined_call_operand.vmem [shape: f32[20,5], index: 2, kind: input, shape index: {}]
  %s3 = inlined_call_operand.hbm [shape: f32[1,256], index: 3, kind: output, shape index: {}]
  %s4 = sld [smem:[#allocation0]]
  $region26: #{tpu_custom_call.1} parent=0
    _
  %s6 = ssub.s32 1, %s4
  %s7 = scalar_select 0, %s6, %s4
  $region1: #{tpu_custom_call.1} parent=0
    #allocation2 [shape = 'u8[73728]{0}', space=vmem, size = 0x12000, scoped, tag = 'input window, operand 1, single buffered']
    #allocation3 [shape = 's32[1]{0}', space=sflag, size = 0x4, scoped, tag = 'scoped memory for tpu_custom_call.1']
    #allocation4 [shape = 's32[1]{0}', space=sflag, size = 0x4, scoped, tag = 'scoped memory for tpu_custom_call.1']
    #allocation5 [shape = 'u8[1024]{0}', space=vmem, size = 0x400, scoped, tag = 'output window, operand 0, single buffered']
    %8 = vsyncpa [#allocation3], 0
    %9 = vsyncpa [#allocation4], 0
    // Predicated region
    $region2: #{tpu_custom_call.1} parent=1 // pred_check
      _
    $region3: #{tpu_custom_call.1} parent=1 // pred_check_branch
      %11 = sbr.rel (0) target = $region5
    $region4: #{tpu_custom_call.1} parent=1 // pred_region
      _
    $region5: #{tpu_custom_call.1} parent=1 // pred_fallthru
      _
    // Predicated region
    $region6: #{tpu_custom_call.1} parent=1 // pred_check
      _
    $region7: #{tpu_custom_call.1} parent=1 // pred_check_branch
      %13 = sbr.rel (0) target = $region9
    $region8: #{tpu_custom_call.1} parent=1 // pred_region
      %s15 = ssub.s32 2304, 2304
      %16 = vsyncadd [#allocation3], %s15
      %s17 = sshll.u32 [#allocation2], 4
      %s18 = int_to_ptr.vmem [resolvable:$true] %s17
      %23 = dma.hbm_to_vmem [thread:$0]  %s1, 2304, %s18, [#allocation3], 128, 128, 8
    $region9: #{tpu_custom_call.1} parent=1 // pred_fallthru
      _
    // Predicated region
    $region10: #{tpu_custom_call.1} parent=1 // pred_check
      _
    $region11: #{tpu_custom_call.1} parent=1 // pred_check_branch
      %25 = sbr.rel (0) target = $region13
    $region12: #{tpu_custom_call.1} parent=1 // pred_region
      _
    $region13: #{tpu_custom_call.1} parent=1 // pred_fallthru
      _
    // Predicated region
    $region14: #{tpu_custom_call.1} parent=1 // pred_check
      _
    $region15: #{tpu_custom_call.1} parent=1 // pred_check_branch
      %27 = sbr.rel (0) target = $region17
    $region16: #{tpu_custom_call.1} parent=1 // pred_region
      %28 = dma.done [#allocation3], 2304
    $region17: #{tpu_custom_call.1} parent=1 // pred_fallthru
      _
    %v29 = vld [vmem:[%s0] sm:$0xf]
    %v30 = vld [vmem:[%s2] sm:$0xff]
    %v31 = vld [vmem:[%s2 + $0x8] sm:$0xff]
    %v32 = vld [vmem:[%s2 + $0x10] sm:$0xf]
    %34 = vset.pattern.permute.xlu0 0
    %35 = vperm.xlu0 %34, %v30
    %v36 = vpop.permute.xlu0 %35
    %39 = vset.pattern.permute.xlu0 0
    %40 = vperm.xlu0 %39, %v31
    %v41 = vpop.permute.xlu0 %40
    %44 = vset.pattern.permute.xlu0 0
    %45 = vperm.xlu0 %44, %v32
    %v46 = vpop.permute.xlu0 %45
    %v49 = vlaneseq
    %v50 = vshrl.u32 %v49, 7
    %v51 = vsub.s32 0, %v50
    %v52 = vrot.slane %v29, %v51
    %v53 = vlaneseq
    %v54 = vshrl.u32 %v53, 7
    %v55 = vsub.s32 2, %v54
    %v56 = vrot.slane %v29, %v55
    %v59 = vlaneseq
    %v60 = vshrl.u32 %v59, 7
    %v61 = vsub.s32 0, %v60
    %v62 = vrot.slane %v52, %v61
    %v63 = vlaneseq
    %v64 = vshrl.u32 %v63, 7
    %v65 = vsub.s32 0, %v64
    %v66 = vrot.slane %v56, %v65
    %v67 = vmul.f32 %v36, %v62
    %v68 = vmul.f32 %v36, %v66
    %v69 = vmul.f32 %v41, %v62
    %v70 = vmul.f32 %v41, %v66
    %v71 = vmul.f32 %v46, %v62
    %v72 = vmul.f32 %v46, %v66
    %73 = vset.pattern.permute.xlu0 1
    %74 = vperm.xlu0 %73, %v30
    %v75 = vpop.permute.xlu0 %74
    %77 = vset.pattern.permute.xlu0 1
    %78 = vperm.xlu0 %77, %v31
    %v79 = vpop.permute.xlu0 %78
    %81 = vset.pattern.permute.xlu0 1
    %82 = vperm.xlu0 %81, %v32
    %v83 = vpop.permute.xlu0 %82
    %v85 = vlaneseq
    %v86 = vshrl.u32 %v85, 7
    %v87 = vsub.s32 1, %v86
    %v88 = vrot.slane %v29, %v87
    %v89 = vlaneseq
    %v90 = vshrl.u32 %v89, 7
    %v91 = vsub.s32 3, %v90
    %v92 = vrot.slane %v29, %v91
    %v95 = vlaneseq
    %v96 = vshrl.u32 %v95, 7
    %v97 = vsub.s32 1, %v96
    %v98 = vrot.slane %v88, %v97
    %v99 = vlaneseq
    %v100 = vshrl.u32 %v99, 7
    %v101 = vsub.s32 1, %v100
    %v102 = vrot.slane %v92, %v101
    %v103 = vmul.f32 %v75, %v98
    %v104 = vmul.f32 %v75, %v102
    %v105 = vmul.f32 %v79, %v98
    %v106 = vmul.f32 %v79, %v102
    %v107 = vmul.f32 %v83, %v98
    %v108 = vmul.f32 %v83, %v102
    %v109 = vadd.f32 %v67, %v103
    %v110 = vadd.f32 %v68, %v104
    %v111 = vadd.f32 %v69, %v105
    %v112 = vadd.f32 %v70, %v106
    %v113 = vadd.f32 %v71, %v107
    %v114 = vadd.f32 %v72, %v108
    %115 = vset.pattern.permute.xlu0 2
    %116 = vperm.xlu0 %115, %v30
    %v117 = vpop.permute.xlu0 %116
    %119 = vset.pattern.permute.xlu0 2
    %120 = vperm.xlu0 %119, %v31
    %v121 = vpop.permute.xlu0 %120
    %123 = vset.pattern.permute.xlu0 2
    %124 = vperm.xlu0 %123, %v32
    %v125 = vpop.permute.xlu0 %124
    %v127 = vadd.f32 %v109, %v117
    %v128 = vadd.f32 %v110, %v117
    %v129 = vadd.f32 %v111, %v121
    %v130 = vadd.f32 %v112, %v121
    %v131 = vadd.f32 %v113, %v125
    %v132 = vadd.f32 %v114, %v125
    %v133 = vtanh.pop %v127
    %v134 = vtanh.pop %v128
    %v135 = vtanh.pop %v129
    %v136 = vtanh.pop %v130
    %v137 = vtanh.pop %v131
    %v138 = vtanh.pop %v132
    %v139 = vld [vmem:[#allocation2] sm:$0xff]
    %v140 = vld [vmem:[#allocation2 + $0x8] sm:$0xff]
    %v141 = vld [vmem:[#allocation2 + $0x10] sm:$0xf]
    %143 = vset.pattern.permute.xlu0 20
    %144 = vperm.xlu0 %143, %v139
    %v145 = vpop.permute.xlu0 %144
    %148 = vset.pattern.permute.xlu0 20
    %149 = vperm.xlu0 %148, %v140
    %v150 = vpop.permute.xlu0 %149
    %153 = vset.pattern.permute.xlu0 20
    %154 = vperm.xlu0 %153, %v141
    %v155 = vpop.permute.xlu0 %154
    %vm157 = vcmask 162816
    %v158 = vsel %vm157, %v139, 0
    %v160 = vsel %vm157, %v140, 0
    %v162 = vsel %vm157, %v141, 0
    %vm164 = vcmask 1043456
    %v166 = vsel %vm164, %v137, 0
    %v169 = vsel %vm164, %v138, 0
    %171 = vmatprep.subr.mxu0 0.0
    %172 = vmatpush1.msra.mxu0 0.0
    %173 = vmatprep.subr.mxu0 0.0
    %174 = vmatpush1.msra.mxu0 0.0
    %175 = vmatprep.subr.mxu0 0.0
    %176 = vmatpush1.msra.mxu0 0.0
    %177 = vmatprep.subr.mxu0 0.0
    %178 = vmatpush1.msra.mxu0 0.0
    %179 = vmatprep.subr.mxu0 0.0
    %180 = vmatpush1.msra.mxu0 0.0
    %181 = vmatprep.subr.mxu0 0.0
    %182 = vmatpush1.msra.mxu0 0.0
    %183 = vmatprep.subr.mxu0 0.0
    %184 = vmatpush1.msra.mxu0 0.0
    %185 = vmatprep.subr.mxu0 0.0
    %186 = vmatpush1.msra.mxu0 0.0
    %187 = vmatprep.subr.mxu0 0.0
    %188 = vmatpush1.msra.mxu0 0.0
    %189 = vmatprep.subr.mxu0 0.0
    %190 = vmatpush1.msra.mxu0 0.0
    %191 = vmatprep.subr.mxu0 0.0
    %192 = vmatpush1.msra.mxu0 0.0
    %193 = vmatprep.subr.mxu0 0.0
    %194 = vmatpush1.msra.mxu0 0.0
    %195 = vmatprep.subr.mxu0 0.0
    %196 = vmatpush1.msra.mxu0 0.0
    %197 = vmatprep.subr.mxu0 %v169
    %198 = vmatpush1.msra.mxu0 %v166
    %199 = vmatprep.subr.mxu0 %v136
    %200 = vmatpush1.msra.mxu0 %v135
    %201 = vmatprep.subr.mxu0 %v134
    %202 = vmatpush1.msra.mxu0 %v133
    %203 = vmatprep.subr.mxu0 0.0
    %204 = vmatpush2.msra.mxu0 0.0
    %205 = vmatprep.subr.mxu0 0.0
    %206 = vmatpush2.msra.mxu0 0.0
    %207 = vmatprep.subr.mxu0 0.0
    %208 = vmatpush2.msra.mxu0 0.0
    %209 = vmatprep.subr.mxu0 0.0
    %210 = vmatpush2.msra.mxu0 0.0
    %211 = vmatprep.subr.mxu0 0.0
    %212 = vmatpush2.msra.mxu0 0.0
    %213 = vmatprep.subr.mxu0 0.0
    %214 = vmatpush2.msra.mxu0 0.0
    %215 = vmatprep.subr.mxu0 0.0
    %216 = vmatpush2.msra.mxu0 0.0
    %217 = vmatprep.subr.mxu0 0.0
    %218 = vmatpush2.msra.mxu0 0.0
    %219 = vmatprep.subr.mxu0 0.0
    %220 = vmatpush2.msra.mxu0 0.0
    %221 = vmatprep.subr.mxu0 0.0
    %222 = vmatpush2.msra.mxu0 0.0
    %223 = vmatprep.subr.mxu0 0.0
    %224 = vmatpush2.msra.mxu0 0.0
    %225 = vmatprep.subr.mxu0 0.0
    %226 = vmatpush2.msra.mxu0 0.0
    %227 = vmatprep.subr.mxu0 0.0
    %228 = vmatpush2.msra.mxu0 0.0
    %229 = vmatprep.subr.mxu0 0.0
    %230 = vmatpush2.msra.mxu0 0.0
    %231 = vmatprep.subr.mxu0 0.0
    %232 = vmatpush2.msra.mxu0 0.0
    %233 = vmatprep.subr.mxu0 0.0
    %234 = vmatpush2.msra.mxu0 0.0
    %235 = vmatprep.mubr.f32.mxu0 0.0
    %236 = vmatmul.mubr.f32.gmra.mxu0 %v158
    %v237 = vpop.f32.mrf.mxu0
    %v238 = vadd.f32 %v145, %v237
    %v239 = vpop.f32.mrf.mxu0
    %v240 = vadd.f32 %v145, %v239
    %241 = vmatprep.mubr.f32.mxu0 0.0
    %242 = vmatmul.mubr.f32.gmra.mxu0 %v160
    %v243 = vpop.f32.mrf.mxu0
    %v244 = vadd.f32 %v150, %v243
    %v245 = vpop.f32.mrf.mxu0
    %v246 = vadd.f32 %v150, %v245
    %247 = vmatprep.mubr.f32.mxu0 0.0
    %248 = vmatmul.mubr.f32.gmra.mxu0 %v162
    %v249 = vpop.f32.mrf.mxu0
    %v250 = vadd.f32 %v155, %v249
    %v251 = vpop.f32.mrf.mxu0
    %v252 = vadd.f32 %v155, %v251
    %253 = vdwg.mxu0
    %v254 = vtanh.pop %v238
    %v255 = vtanh.pop %v240
    %v256 = vtanh.pop %v244
    %v257 = vtanh.pop %v246
    %v258 = vtanh.pop %v250
    %v259 = vtanh.pop %v252
    %s260 = scalar_lea.vmem [#allocation2], 24
    %v261 = vld [vmem:[%s260] sm:$0xff]
    %v262 = vld [vmem:[%s260 + $0x8] sm:$0xff]
    %v263 = vld [vmem:[%s260 + $0x10] sm:$0xf]
    %265 = vset.pattern.permute.xlu0 20
    %266 = vperm.xlu0 %265, %v261
    %v267 = vpop.permute.xlu0 %266
    %270 = vset.pattern.permute.xlu0 20
    %271 = vperm.xlu0 %270, %v262
    %v272 = vpop.permute.xlu0 %271
    %275 = vset.pattern.permute.xlu0 20
    %276 = vperm.xlu0 %275, %v263
    %v277 = vpop.permute.xlu0 %276
    %v279 = vsel %vm157, %v261, 0
    %v281 = vsel %vm157, %v262, 0
    %v283 = vsel %vm157, %v263, 0
    %v286 = vsel %vm164, %v258, 0
    %v289 = vsel %vm164, %v259, 0
    %291 = vmatprep.subr.mxu0 0.0
    %292 = vmatpush1.msra.mxu0 0.0
    %293 = vmatprep.subr.mxu0 0.0
    %294 = vmatpush1.msra.mxu0 0.0
    %295 = vmatprep.subr.mxu0 0.0
    %296 = vmatpush1.msra.mxu0 0.0
    %297 = vmatprep.subr.mxu0 0.0
    %298 = vmatpush1.msra.mxu0 0.0
    %299 = vmatprep.subr.mxu0 0.0
    %300 = vmatpush1.msra.mxu0 0.0
    %301 = vmatprep.subr.mxu0 0.0
    %302 = vmatpush1.msra.mxu0 0.0
    %303 = vmatprep.subr.mxu0 0.0
    %304 = vmatpush1.msra.mxu0 0.0
    %305 = vmatprep.subr.mxu0 0.0
    %306 = vmatpush1.msra.mxu0 0.0
    %307 = vmatprep.subr.mxu0 0.0
    %308 = vmatpush1.msra.mxu0 0.0
    %309 = vmatprep.subr.mxu0 0.0
    %310 = vmatpush1.msra.mxu0 0.0
    %311 = vmatprep.subr.mxu0 0.0
    %312 = vmatpush1.msra.mxu0 0.0
    %313 = vmatprep.subr.mxu0 0.0
    %314 = vmatpush1.msra.mxu0 0.0
    %315 = vmatprep.subr.mxu0 0.0
    %316 = vmatpush1.msra.mxu0 0.0
    %317 = vmatprep.subr.mxu0 %v289
    %318 = vmatpush1.msra.mxu0 %v286
    %319 = vmatprep.subr.mxu0 %v257
    %320 = vmatpush1.msra.mxu0 %v256
    %321 = vmatprep.subr.mxu0 %v255
    %322 = vmatpush1.msra.mxu0 %v254
    %323 = vmatprep.subr.mxu0 0.0
    %324 = vmatpush2.msra.mxu0 0.0
    %325 = vmatprep.subr.mxu0 0.0
    %326 = vmatpush2.msra.mxu0 0.0
    %327 = vmatprep.subr.mxu0 0.0
    %328 = vmatpush2.msra.mxu0 0.0
    %329 = vmatprep.subr.mxu0 0.0
    %330 = vmatpush2.msra.mxu0 0.0
    %331 = vmatprep.subr.mxu0 0.0
    %332 = vmatpush2.msra.mxu0 0.0
    %333 = vmatprep.subr.mxu0 0.0
    %334 = vmatpush2.msra.mxu0 0.0
    %335 = vmatprep.subr.mxu0 0.0
    %336 = vmatpush2.msra.mxu0 0.0
    %337 = vmatprep.subr.mxu0 0.0
    %338 = vmatpush2.msra.mxu0 0.0
    %339 = vmatprep.subr.mxu0 0.0
    %340 = vmatpush2.msra.mxu0 0.0
    %341 = vmatprep.subr.mxu0 0.0
    %342 = vmatpush2.msra.mxu0 0.0
    %343 = vmatprep.subr.mxu0 0.0
    %344 = vmatpush2.msra.mxu0 0.0
    %345 = vmatprep.subr.mxu0 0.0
    %346 = vmatpush2.msra.mxu0 0.0
    %347 = vmatprep.subr.mxu0 0.0
    %348 = vmatpush2.msra.mxu0 0.0
    %349 = vmatprep.subr.mxu0 0.0
    %350 = vmatpush2.msra.mxu0 0.0
    %351 = vmatprep.subr.mxu0 0.0
    %352 = vmatpush2.msra.mxu0 0.0
    %353 = vmatprep.subr.mxu0 0.0
    %354 = vmatpush2.msra.mxu0 0.0
    %355 = vmatprep.mubr.f32.mxu0 0.0
    %356 = vmatmul.mubr.f32.gmra.mxu0 %v279
    %v357 = vpop.f32.mrf.mxu0
    %v358 = vadd.f32 %v267, %v357
    %v359 = vpop.f32.mrf.mxu0
    %v360 = vadd.f32 %v267, %v359
    %361 = vmatprep.mubr.f32.mxu0 0.0
    %362 = vmatmul.mubr.f32.gmra.mxu0 %v281
    %v363 = vpop.f32.mrf.mxu0
    %v364 = vadd.f32 %v272, %v363
    %v365 = vpop.f32.mrf.mxu0
    %v366 = vadd.f32 %v272, %v365
    %367 = vmatprep.mubr.f32.mxu0 0.0
    %368 = vmatmul.mubr.f32.gmra.mxu0 %v283
    %v369 = vpop.f32.mrf.mxu0
    %v370 = vadd.f32 %v277, %v369
    %v371 = vpop.f32.mrf.mxu0
    %v372 = vadd.f32 %v277, %v371
    %373 = vdwg.mxu0
    %v374 = vtanh.pop %v358
    %v375 = vtanh.pop %v360
    %v376 = vtanh.pop %v364
    %v377 = vtanh.pop %v366
    %v378 = vtanh.pop %v370
    %v379 = vtanh.pop %v372
    %s380 = scalar_lea.vmem [#allocation2], 48
    %v381 = vld [vmem:[%s380] sm:$0xff]
    %v382 = vld [vmem:[%s380 + $0x8] sm:$0xff]
    %v383 = vld [vmem:[%s380 + $0x10] sm:$0xf]
    %385 = vset.pattern.permute.xlu0 20
    %386 = vperm.xlu0 %385, %v381
    %v387 = vpop.permute.xlu0 %386
    %390 = vset.pattern.permute.xlu0 20
    %391 = vperm.xlu0 %390, %v382
    %v392 = vpop.permute.xlu0 %391
    %395 = vset.pattern.permute.xlu0 20
    %396 = vperm.xlu0 %395, %v383
    %v397 = vpop.permute.xlu0 %396
    %v399 = vsel %vm157, %v381, 0
    %v401 = vsel %vm157, %v382, 0
    %v403 = vsel %vm157, %v383, 0
    %v406 = vsel %vm164, %v378, 0
    %v409 = vsel %vm164, %v379, 0
    %411 = vmatprep.subr.mxu0 0.0
    %412 = vmatpush1.msra.mxu0 0.0
    %413 = vmatprep.subr.mxu0 0.0
    %414 = vmatpush1.msra.mxu0 0.0
    %415 = vmatprep.subr.mxu0 0.0
    %416 = vmatpush1.msra.mxu0 0.0
    %417 = vmatprep.subr.mxu0 0.0
    %418 = vmatpush1.msra.mxu0 0.0
    %419 = vmatprep.subr.mxu0 0.0
    %420 = vmatpush1.msra.mxu0 0.0
    %421 = vmatprep.subr.mxu0 0.0
    %422 = vmatpush1.msra.mxu0 0.0
    %423 = vmatprep.subr.mxu0 0.0
    %424 = vmatpush1.msra.mxu0 0.0
    %425 = vmatprep.subr.mxu0 0.0
    %426 = vmatpush1.msra.mxu0 0.0
    %427 = vmatprep.subr.mxu0 0.0
    %428 = vmatpush1.msra.mxu0 0.0
    %429 = vmatprep.subr.mxu0 0.0
    %430 = vmatpush1.msra.mxu0 0.0
    %431 = vmatprep.subr.mxu0 0.0
    %432 = vmatpush1.msra.mxu0 0.0
    %433 = vmatprep.subr.mxu0 0.0
    %434 = vmatpush1.msra.mxu0 0.0
    %435 = vmatprep.subr.mxu0 0.0
    %436 = vmatpush1.msra.mxu0 0.0
    %437 = vmatprep.subr.mxu0 %v409
    %438 = vmatpush1.msra.mxu0 %v406
    %439 = vmatprep.subr.mxu0 %v377
    %440 = vmatpush1.msra.mxu0 %v376
    %441 = vmatprep.subr.mxu0 %v375
    %442 = vmatpush1.msra.mxu0 %v374
    %443 = vmatprep.subr.mxu0 0.0
    %444 = vmatpush2.msra.mxu0 0.0
    %445 = vmatprep.subr.mxu0 0.0
    %446 = vmatpush2.msra.mxu0 0.0
    %447 = vmatprep.subr.mxu0 0.0
    %448 = vmatpush2.msra.mxu0 0.0
    %449 = vmatprep.subr.mxu0 0.0
    %450 = vmatpush2.msra.mxu0 0.0
    %451 = vmatprep.subr.mxu0 0.0
    %452 = vmatpush2.msra.mxu0 0.0
    %453 = vmatprep.subr.mxu0 0.0
    %454 = vmatpush2.msra.mxu0 0.0
    %455 = vmatprep.subr.mxu0 0.0
    %456 = vmatpush2.msra.mxu0 0.0
    %457 = vmatprep.subr.mxu0 0.0
    %458 = vmatpush2.msra.mxu0 0.0
    %459 = vmatprep.subr.mxu0 0.0
    %460 = vmatpush2.msra.mxu0 0.0
    %461 = vmatprep.subr.mxu0 0.0
    %462 = vmatpush2.msra.mxu0 0.0
    %463 = vmatprep.subr.mxu0 0.0
    %464 = vmatpush2.msra.mxu0 0.0
    %465 = vmatprep.subr.mxu0 0.0
    %466 = vmatpush2.msra.mxu0 0.0
    %467 = vmatprep.subr.mxu0 0.0
    %468 = vmatpush2.msra.mxu0 0.0
    %469 = vmatprep.subr.mxu0 0.0
    %470 = vmatpush2.msra.mxu0 0.0
    %471 = vmatprep.subr.mxu0 0.0
    %472 = vmatpush2.msra.mxu0 0.0
    %473 = vmatprep.subr.mxu0 0.0
    %474 = vmatpush2.msra.mxu0 0.0
    %475 = vmatprep.mubr.f32.mxu0 0.0
    %476 = vmatmul.mubr.f32.gmra.mxu0 %v399
    %v477 = vpop.f32.mrf.mxu0
    %v478 = vadd.f32 %v387, %v477
    %v479 = vpop.f32.mrf.mxu0
    %v480 = vadd.f32 %v387, %v479
    %481 = vmatprep.mubr.f32.mxu0 0.0
    %482 = vmatmul.mubr.f32.gmra.mxu0 %v401
    %v483 = vpop.f32.mrf.mxu0
    %v484 = vadd.f32 %v392, %v483
    %v485 = vpop.f32.mrf.mxu0
    %v486 = vadd.f32 %v392, %v485
    %487 = vmatprep.mubr.f32.mxu0 0.0
    %488 = vmatmul.mubr.f32.gmra.mxu0 %v403
    %v489 = vpop.f32.mrf.mxu0
    %v490 = vadd.f32 %v397, %v489
    %v491 = vpop.f32.mrf.mxu0
    %v492 = vadd.f32 %v397, %v491
    %493 = vdwg.mxu0
    %v494 = vtanh.pop %v478
    %v495 = vtanh.pop %v480
    %v496 = vtanh.pop %v484
    %v497 = vtanh.pop %v486
    %v498 = vtanh.pop %v490
    %v499 = vtanh.pop %v492
    %s500 = scalar_lea.vmem [#allocation2], 72
    %v501 = vld [vmem:[%s500] sm:$0xff]
    %v502 = vld [vmem:[%s500 + $0x8] sm:$0xff]
    %v503 = vld [vmem:[%s500 + $0x10] sm:$0xf]
    %505 = vset.pattern.permute.xlu0 20
    %506 = vperm.xlu0 %505, %v501
    %v507 = vpop.permute.xlu0 %506
    %510 = vset.pattern.permute.xlu0 20
    %511 = vperm.xlu0 %510, %v502
    %v512 = vpop.permute.xlu0 %511
    %515 = vset.pattern.permute.xlu0 20
    %516 = vperm.xlu0 %515, %v503
    %v517 = vpop.permute.xlu0 %516
    %v519 = vsel %vm157, %v501, 0
    %v521 = vsel %vm157, %v502, 0
    %v523 = vsel %vm157, %v503, 0
    %v526 = vsel %vm164, %v498, 0
    %v529 = vsel %vm164, %v499, 0
    %531 = vmatprep.subr.mxu0 0.0
    %532 = vmatpush1.msra.mxu0 0.0
    %533 = vmatprep.subr.mxu0 0.0
    %534 = vmatpush1.msra.mxu0 0.0
    %535 = vmatprep.subr.mxu0 0.0
    %536 = vmatpush1.msra.mxu0 0.0
    %537 = vmatprep.subr.mxu0 0.0
    %538 = vmatpush1.msra.mxu0 0.0
    %539 = vmatprep.subr.mxu0 0.0
    %540 = vmatpush1.msra.mxu0 0.0
    %541 = vmatprep.subr.mxu0 0.0
    %542 = vmatpush1.msra.mxu0 0.0
    %543 = vmatprep.subr.mxu0 0.0
    %544 = vmatpush1.msra.mxu0 0.0
    %545 = vmatprep.subr.mxu0 0.0
    %546 = vmatpush1.msra.mxu0 0.0
    %547 = vmatprep.subr.mxu0 0.0
    %548 = vmatpush1.msra.mxu0 0.0
    %549 = vmatprep.subr.mxu0 0.0
    %550 = vmatpush1.msra.mxu0 0.0
    %551 = vmatprep.subr.mxu0 0.0
    %552 = vmatpush1.msra.mxu0 0.0
    %553 = vmatprep.subr.mxu0 0.0
    %554 = vmatpush1.msra.mxu0 0.0
    %555 = vmatprep.subr.mxu0 0.0
    %556 = vmatpush1.msra.mxu0 0.0
    %557 = vmatprep.subr.mxu0 %v529
    %558 = vmatpush1.msra.mxu0 %v526
    %559 = vmatprep.subr.mxu0 %v497
    %560 = vmatpush1.msra.mxu0 %v496
    %561 = vmatprep.subr.mxu0 %v495
    %562 = vmatpush1.msra.mxu0 %v494
    %563 = vmatprep.subr.mxu0 0.0
    %564 = vmatpush2.msra.mxu0 0.0
    %565 = vmatprep.subr.mxu0 0.0
    %566 = vmatpush2.msra.mxu0 0.0
    %567 = vmatprep.subr.mxu0 0.0
    %568 = vmatpush2.msra.mxu0 0.0
    %569 = vmatprep.subr.mxu0 0.0
    %570 = vmatpush2.msra.mxu0 0.0
    %571 = vmatprep.subr.mxu0 0.0
    %572 = vmatpush2.msra.mxu0 0.0
    %573 = vmatprep.subr.mxu0 0.0
    %574 = vmatpush2.msra.mxu0 0.0
    %575 = vmatprep.subr.mxu0 0.0
    %576 = vmatpush2.msra.mxu0 0.0
    %577 = vmatprep.subr.mxu0 0.0
    %578 = vmatpush2.msra.mxu0 0.0
    %579 = vmatprep.subr.mxu0 0.0
    %580 = vmatpush2.msra.mxu0 0.0
    %581 = vmatprep.subr.mxu0 0.0
    %582 = vmatpush2.msra.mxu0 0.0
    %583 = vmatprep.subr.mxu0 0.0
    %584 = vmatpush2.msra.mxu0 0.0
    %585 = vmatprep.subr.mxu0 0.0
    %586 = vmatpush2.msra.mxu0 0.0
    %587 = vmatprep.subr.mxu0 0.0
    %588 = vmatpush2.msra.mxu0 0.0
    %589 = vmatprep.subr.mxu0 0.0
    %590 = vmatpush2.msra.mxu0 0.0
    %591 = vmatprep.subr.mxu0 0.0
    %592 = vmatpush2.msra.mxu0 0.0
    %593 = vmatprep.subr.mxu0 0.0
    %594 = vmatpush2.msra.mxu0 0.0
    %595 = vmatprep.mubr.f32.mxu0 0.0
    %596 = vmatmul.mubr.f32.gmra.mxu0 %v519
    %v597 = vpop.f32.mrf.mxu0
    %v598 = vadd.f32 %v507, %v597
    %v599 = vpop.f32.mrf.mxu0
    %v600 = vadd.f32 %v507, %v599
    %601 = vmatprep.mubr.f32.mxu0 0.0
    %602 = vmatmul.mubr.f32.gmra.mxu0 %v521
    %v603 = vpop.f32.mrf.mxu0
    %v604 = vadd.f32 %v512, %v603
    %v605 = vpop.f32.mrf.mxu0
    %v606 = vadd.f32 %v512, %v605
    %607 = vmatprep.mubr.f32.mxu0 0.0
    %608 = vmatmul.mubr.f32.gmra.mxu0 %v523
    %v609 = vpop.f32.mrf.mxu0
    %v610 = vadd.f32 %v517, %v609
    %v611 = vpop.f32.mrf.mxu0
    %v612 = vadd.f32 %v517, %v611
    %613 = vdwg.mxu0
    %v614 = vtanh.pop %v598
    %v615 = vtanh.pop %v600
    %v616 = vtanh.pop %v604
    %v617 = vtanh.pop %v606
    %v618 = vtanh.pop %v610
    %v619 = vtanh.pop %v612
    %s620 = scalar_lea.vmem [#allocation2], 96
    %v621 = vld [vmem:[%s620] sm:$0xff]
    %v622 = vld [vmem:[%s620 + $0x8] sm:$0xff]
    %v623 = vld [vmem:[%s620 + $0x10] sm:$0xf]
    %625 = vset.pattern.permute.xlu0 20
    %626 = vperm.xlu0 %625, %v621
    %v627 = vpop.permute.xlu0 %626
    %630 = vset.pattern.permute.xlu0 20
    %631 = vperm.xlu0 %630, %v622
    %v632 = vpop.permute.xlu0 %631
    %635 = vset.pattern.permute.xlu0 20
    %636 = vperm.xlu0 %635, %v623
    %v637 = vpop.permute.xlu0 %636
    %v639 = vsel %vm157, %v621, 0
    %v641 = vsel %vm157, %v622, 0
    %v643 = vsel %vm157, %v623, 0
    %v646 = vsel %vm164, %v618, 0
    %v649 = vsel %vm164, %v619, 0
    %651 = vmatprep.subr.mxu0 0.0
    %652 = vmatpush1.msra.mxu0 0.0
    %653 = vmatprep.subr.mxu0 0.0
    %654 = vmatpush1.msra.mxu0 0.0
    %655 = vmatprep.subr.mxu0 0.0
    %656 = vmatpush1.msra.mxu0 0.0
    %657 = vmatprep.subr.mxu0 0.0
    %658 = vmatpush1.msra.mxu0 0.0
    %659 = vmatprep.subr.mxu0 0.0
    %660 = vmatpush1.msra.mxu0 0.0
    %661 = vmatprep.subr.mxu0 0.0
    %662 = vmatpush1.msra.mxu0 0.0
    %663 = vmatprep.subr.mxu0 0.0
    %664 = vmatpush1.msra.mxu0 0.0
    %665 = vmatprep.subr.mxu0 0.0
    %666 = vmatpush1.msra.mxu0 0.0
    %667 = vmatprep.subr.mxu0 0.0
    %668 = vmatpush1.msra.mxu0 0.0
    %669 = vmatprep.subr.mxu0 0.0
    %670 = vmatpush1.msra.mxu0 0.0
    %671 = vmatprep.subr.mxu0 0.0
    %672 = vmatpush1.msra.mxu0 0.0
    %673 = vmatprep.subr.mxu0 0.0
    %674 = vmatpush1.msra.mxu0 0.0
    %675 = vmatprep.subr.mxu0 0.0
    %676 = vmatpush1.msra.mxu0 0.0
    %677 = vmatprep.subr.mxu0 %v649
    %678 = vmatpush1.msra.mxu0 %v646
    %679 = vmatprep.subr.mxu0 %v617
    %680 = vmatpush1.msra.mxu0 %v616
    %681 = vmatprep.subr.mxu0 %v615
    %682 = vmatpush1.msra.mxu0 %v614
    %683 = vmatprep.subr.mxu0 0.0
    %684 = vmatpush2.msra.mxu0 0.0
    %685 = vmatprep.subr.mxu0 0.0
    %686 = vmatpush2.msra.mxu0 0.0
    %687 = vmatprep.subr.mxu0 0.0
    %688 = vmatpush2.msra.mxu0 0.0
    %689 = vmatprep.subr.mxu0 0.0
    %690 = vmatpush2.msra.mxu0 0.0
    %691 = vmatprep.subr.mxu0 0.0
    %692 = vmatpush2.msra.mxu0 0.0
    %693 = vmatprep.subr.mxu0 0.0
    %694 = vmatpush2.msra.mxu0 0.0
    %695 = vmatprep.subr.mxu0 0.0
    %696 = vmatpush2.msra.mxu0 0.0
    %697 = vmatprep.subr.mxu0 0.0
    %698 = vmatpush2.msra.mxu0 0.0
    %699 = vmatprep.subr.mxu0 0.0
    %700 = vmatpush2.msra.mxu0 0.0
    %701 = vmatprep.subr.mxu0 0.0
    %702 = vmatpush2.msra.mxu0 0.0
    %703 = vmatprep.subr.mxu0 0.0
    %704 = vmatpush2.msra.mxu0 0.0
    %705 = vmatprep.subr.mxu0 0.0
    %706 = vmatpush2.msra.mxu0 0.0
    %707 = vmatprep.subr.mxu0 0.0
    %708 = vmatpush2.msra.mxu0 0.0
    %709 = vmatprep.subr.mxu0 0.0
    %710 = vmatpush2.msra.mxu0 0.0
    %711 = vmatprep.subr.mxu0 0.0
    %712 = vmatpush2.msra.mxu0 0.0
    %713 = vmatprep.subr.mxu0 0.0
    %714 = vmatpush2.msra.mxu0 0.0
    %715 = vmatprep.mubr.f32.mxu0 0.0
    %716 = vmatmul.mubr.f32.gmra.mxu0 %v639
    %v717 = vpop.f32.mrf.mxu0
    %v718 = vadd.f32 %v627, %v717
    %v719 = vpop.f32.mrf.mxu0
    %v720 = vadd.f32 %v627, %v719
    %721 = vmatprep.mubr.f32.mxu0 0.0
    %722 = vmatmul.mubr.f32.gmra.mxu0 %v641
    %v723 = vpop.f32.mrf.mxu0
    %v724 = vadd.f32 %v632, %v723
    %v725 = vpop.f32.mrf.mxu0
    %v726 = vadd.f32 %v632, %v725
    %727 = vmatprep.mubr.f32.mxu0 0.0
    %728 = vmatmul.mubr.f32.gmra.mxu0 %v643
    %v729 = vpop.f32.mrf.mxu0
    %v730 = vadd.f32 %v637, %v729
    %v731 = vpop.f32.mrf.mxu0
    %v732 = vadd.f32 %v637, %v731
    %733 = vdwg.mxu0
    %v734 = vtanh.pop %v718
    %v735 = vtanh.pop %v720
    %v736 = vtanh.pop %v724
    %v737 = vtanh.pop %v726
    %v738 = vtanh.pop %v730
    %v739 = vtanh.pop %v732
    %s740 = scalar_lea.vmem [#allocation2], 120
    %v741 = vld [vmem:[%s740] sm:$0xff]
    %v742 = vld [vmem:[%s740 + $0x8] sm:$0xff]
    %v743 = vld [vmem:[%s740 + $0x10] sm:$0xf]
    %745 = vset.pattern.permute.xlu0 20
    %746 = vperm.xlu0 %745, %v741
    %v747 = vpop.permute.xlu0 %746
    %750 = vset.pattern.permute.xlu0 20
    %751 = vperm.xlu0 %750, %v742
    %v752 = vpop.permute.xlu0 %751
    %755 = vset.pattern.permute.xlu0 20
    %756 = vperm.xlu0 %755, %v743
    %v757 = vpop.permute.xlu0 %756
    %v759 = vsel %vm157, %v741, 0
    %v761 = vsel %vm157, %v742, 0
    %v763 = vsel %vm157, %v743, 0
    %v766 = vsel %vm164, %v738, 0
    %v769 = vsel %vm164, %v739, 0
    %771 = vmatprep.subr.mxu0 0.0
    %772 = vmatpush1.msra.mxu0 0.0
    %773 = vmatprep.subr.mxu0 0.0
    %774 = vmatpush1.msra.mxu0 0.0
    %775 = vmatprep.subr.mxu0 0.0
    %776 = vmatpush1.msra.mxu0 0.0
    %777 = vmatprep.subr.mxu0 0.0
    %778 = vmatpush1.msra.mxu0 0.0
    %779 = vmatprep.subr.mxu0 0.0
    %780 = vmatpush1.msra.mxu0 0.0
    %781 = vmatprep.subr.mxu0 0.0
    %782 = vmatpush1.msra.mxu0 0.0
    %783 = vmatprep.subr.mxu0 0.0
    %784 = vmatpush1.msra.mxu0 0.0
    %785 = vmatprep.subr.mxu0 0.0
    %786 = vmatpush1.msra.mxu0 0.0
    %787 = vmatprep.subr.mxu0 0.0
    %788 = vmatpush1.msra.mxu0 0.0
    %789 = vmatprep.subr.mxu0 0.0
    %790 = vmatpush1.msra.mxu0 0.0
    %791 = vmatprep.subr.mxu0 0.0
    %792 = vmatpush1.msra.mxu0 0.0
    %793 = vmatprep.subr.mxu0 0.0
    %794 = vmatpush1.msra.mxu0 0.0
    %795 = vmatprep.subr.mxu0 0.0
    %796 = vmatpush1.msra.mxu0 0.0
    %797 = vmatprep.subr.mxu0 %v769
    %798 = vmatpush1.msra.mxu0 %v766
    %799 = vmatprep.subr.mxu0 %v737
    %800 = vmatpush1.msra.mxu0 %v736
    %801 = vmatprep.subr.mxu0 %v735
    %802 = vmatpush1.msra.mxu0 %v734
    %803 = vmatprep.subr.mxu0 0.0
    %804 = vmatpush2.msra.mxu0 0.0
    %805 = vmatprep.subr.mxu0 0.0
    %806 = vmatpush2.msra.mxu0 0.0
    %807 = vmatprep.subr.mxu0 0.0
    %808 = vmatpush2.msra.mxu0 0.0
    %809 = vmatprep.subr.mxu0 0.0
    %810 = vmatpush2.msra.mxu0 0.0
    %811 = vmatprep.subr.mxu0 0.0
    %812 = vmatpush2.msra.mxu0 0.0
    %813 = vmatprep.subr.mxu0 0.0
    %814 = vmatpush2.msra.mxu0 0.0
    %815 = vmatprep.subr.mxu0 0.0
    %816 = vmatpush2.msra.mxu0 0.0
    %817 = vmatprep.subr.mxu0 0.0
    %818 = vmatpush2.msra.mxu0 0.0
    %819 = vmatprep.subr.mxu0 0.0
    %820 = vmatpush2.msra.mxu0 0.0
    %821 = vmatprep.subr.mxu0 0.0
    %822 = vmatpush2.msra.mxu0 0.0
    %823 = vmatprep.subr.mxu0 0.0
    %824 = vmatpush2.msra.mxu0 0.0
    %825 = vmatprep.subr.mxu0 0.0
    %826 = vmatpush2.msra.mxu0 0.0
    %827 = vmatprep.subr.mxu0 0.0
    %828 = vmatpush2.msra.mxu0 0.0
    %829 = vmatprep.subr.mxu0 0.0
    %830 = vmatpush2.msra.mxu0 0.0
    %831 = vmatprep.subr.mxu0 0.0
    %832 = vmatpush2.msra.mxu0 0.0
    %833 = vmatprep.subr.mxu0 0.0
    %834 = vmatpush2.msra.mxu0 0.0
    %835 = vmatprep.mubr.f32.mxu0 0.0
    %836 = vmatmul.mubr.f32.gmra.mxu0 %v759
    %v837 = vpop.f32.mrf.mxu0
    %v838 = vadd.f32 %v747, %v837
    %v839 = vpop.f32.mrf.mxu0
    %v840 = vadd.f32 %v747, %v839
    %841 = vmatprep.mubr.f32.mxu0 0.0
    %842 = vmatmul.mubr.f32.gmra.mxu0 %v761
    %v843 = vpop.f32.mrf.mxu0
    %v844 = vadd.f32 %v752, %v843
    %v845 = vpop.f32.mrf.mxu0
    %v846 = vadd.f32 %v752, %v845
    %847 = vmatprep.mubr.f32.mxu0 0.0
    %848 = vmatmul.mubr.f32.gmra.mxu0 %v763
    %v849 = vpop.f32.mrf.mxu0
    %v850 = vadd.f32 %v757, %v849
    %v851 = vpop.f32.mrf.mxu0
    %v852 = vadd.f32 %v757, %v851
    %853 = vdwg.mxu0
    %v854 = vtanh.pop %v838
    %v855 = vtanh.pop %v840
    %v856 = vtanh.pop %v844
    %v857 = vtanh.pop %v846
    %v858 = vtanh.pop %v850
    %v859 = vtanh.pop %v852
    %860 = vset.pattern.permute.xlu0 3
    %861 = vperm.xlu0 %860, %v30
    %v862 = vpop.permute.xlu0 %861
    %864 = vset.pattern.permute.xlu0 3
    %865 = vperm.xlu0 %864, %v31
    %v866 = vpop.permute.xlu0 %865
    %868 = vset.pattern.permute.xlu0 3
    %869 = vperm.xlu0 %868, %v32
    %v870 = vpop.permute.xlu0 %869
    %v872 = vmul.f32 %v862, %v854
    %v873 = vmul.f32 %v862, %v855
    %v874 = vmul.f32 %v866, %v856
    %v875 = vmul.f32 %v866, %v857
    %v876 = vmul.f32 %v870, %v858
    %v877 = vmul.f32 %v870, %v859
    %v878 = vadd.f32 %v872, %v874
    %v879 = vsel %vm164, %v876, 0.0
    %v880 = vadd.f32 %v878, %v879
    %v881 = vrot.slane %v880, 4
    %v882 = vadd.f32 %v880, %v881
    %v883 = vrot.slane %v882, 2
    %v884 = vadd.f32 %v882, %v883
    %v885 = vrot.slane %v884, 1
    %v886 = vadd.f32 %v884, %v885
    %v887 = vadd.f32 %v873, %v875
    %v888 = vsel %vm164, %v877, 0.0
    %v889 = vadd.f32 %v887, %v888
    %v890 = vrot.slane %v889, 4
    %v891 = vadd.f32 %v889, %v890
    %v892 = vrot.slane %v891, 2
    %v893 = vadd.f32 %v891, %v892
    %v894 = vrot.slane %v893, 1
    %v895 = vadd.f32 %v893, %v894
    %896 = vset.pattern.permute.xlu0 4
    %897 = vperm.xlu0 %896, %v30
    %v898 = vpop.permute.xlu0 %897
    %v900 = vadd.f32 %v886, %v898
    %v901 = vadd.f32 %v895, %v898
    %v902 = vxor.u32 %v900, 2147483648
    %v903 = vxor.u32 %v901, 2147483648
    %v904 = vmul.f32 %v902, 1.442695
    %v905 = vpow.pop %v904
    %v906 = vmul.f32 %v903, 1.442695
    %v907 = vpow.pop %v906
    %v908 = vadd.f32 %v905, 1.0
    %v909 = vadd.f32 %v907, 1.0
    %v910 = vrcp.pop %v908
    %v911 = vmul.f32 1.0, %v910
    %v912 = vrcp.pop %v909
    %v913 = vmul.f32 1.0, %v912
    %v914 = vmul.f32 %v911, 0.8
    %v915 = vmul.f32 %v913, 0.8
    %v916 = vadd.f32 %v914, 0.2
    %v917 = vadd.f32 %v915, 0.2
    %v920 = vcombine.low %v916, %v917
    %v922 = vunpack.c.l.s4 1966171168
    %v923 = vunpack.c.0.s8 %v922
    %v924 = vlaneseq
    %v925 = vshrl.u32 %v924, 7
    %v926 = vsub.s32 %v923, %v925
    %v927 = vrot.slane %v920, %v926
    %v929 = vunpack.c.l.s4 1966171168
    %v930 = vunpack.c.0.s8 %v929
    %v931 = vlaneseq
    %v932 = vshrl.u32 %v931, 7
    %v933 = vsub.s32 %v930, %v932
    %v934 = vrot.slane %v927, %v933
    %v936 = vlaneseq
    %vm937 = vcmp.ge.s32.totalorder %v936, 0
    %vm938 = vcmp.lt.s32.totalorder %v936, 256
    %vm939 = vmand %vm937, %vm938
    %940 = vst.msk [vmem:[#allocation5] sm:$0x3] %vm939, %v934
    // Predicated region
    $region18: #{tpu_custom_call.1} parent=1 // pred_check
      _
    $region19: #{tpu_custom_call.1} parent=1 // pred_check_branch
      %942 = sbr.rel (0) target = $region21
    $region20: #{tpu_custom_call.1} parent=1 // pred_region
      %s944 = ssub.s32 32, 32
      %945 = vsyncadd [#allocation4], %s944
      %s947 = sshll.u32 [#allocation5], 4
      %s948 = int_to_ptr.vmem [resolvable:$true] %s947
      %950 = dma.vmem_to_hbm [thread:$0]  %s948, 32, %s3, [#allocation4]
    $region21: #{tpu_custom_call.1} parent=1 // pred_fallthru
      _
    // Predicated region
    $region22: #{tpu_custom_call.1} parent=1 // pred_check
      _
    $region23: #{tpu_custom_call.1} parent=1 // pred_check_branch
      %952 = sbr.rel (0) target = $region25
    $region24: #{tpu_custom_call.1} parent=1 // pred_region
      %953 = dma.done [#allocation4], 32
    $region25: #{tpu_custom_call.1} parent=1 // pred_fallthru
      _
    %954 = vsyncpa [#allocation3], 1
    %955 = vsyncpa [#allocation4], 1

</llo_original>
